<compile_context>
chip_gen: v7x
topology: tpu7x:2x2x1
jax: 0.10.0
libtpu: 0.0.40
codegen_flags: <defaults>
</compile_context>

<pallas_src>
import functools

import jax
import jax.numpy as jnp
from jax import lax
from jax.experimental import pallas as pl
from jax.experimental.pallas import tpu as pltpu


def _round_up(x, m):
    return ((x + m - 1) // m) * m


def _ctrnn_kernel(state_ref, wi_t_ref, hidden_ref, wh_t_ref, out_ref, *,
                  hidden_size, eps):
    # state_ref:  (B_pad, D_pad)     zero-padded beyond (B, D_in)
    # wi_t_ref:   (D_pad, H_pad)     = Wi.T, zero-padded
    # hidden_ref: (B_pad, H_pad)     zero-padded beyond (B, H)
    # wh_t_ref:   (H_pad, H_pad)     = Wh.T, zero-padded
    # out_ref:    (B_pad, H_pad)
    i = jnp.dot(state_ref[...], wi_t_ref[...],
                preferred_element_type=jnp.float32)
    hh = jnp.dot(hidden_ref[...], wh_t_ref[...],
                 preferred_element_type=jnp.float32)

    # Row-wise InstanceNorm1d over the true hidden width. Padded columns of
    # `hh` are exact zeros (zero weight columns), so plain row reductions over
    # the padded width give correct statistics when divided by the real H.
    inv_n = jnp.float32(1.0 / hidden_size)
    mean = jnp.sum(hh, axis=-1, keepdims=True) * inv_n
    mean_sq = jnp.sum(hh * hh, axis=-1, keepdims=True) * inv_n
    var = mean_sq - mean * mean
    h = (hh - mean) * lax.rsqrt(var + jnp.float32(eps))

    out_ref[...] = jnp.maximum(i + h, 0.0).astype(out_ref.dtype)


def ctrnn_forward(state, wi, wh, hidden=None, *, eps=1e-5):
    """Pallas equivalent of CTRNN.forward(state, hidden) with activ='relu'.

    state:  (B, D_in)
    wi:     (H, D_in)  i2h weight (PyTorch layout, bias=False)
    wh:     (H, H)     h2h weight (PyTorch layout, bias=False)
    hidden: (B, H), (1, H) or None
    Returns (x, new_hidden) with new_hidden == x, both (B, H).
    """
    B, D_in = state.shape
    H = wi.shape[0]
    dtype = state.dtype

    if hidden is None:
        # Matches torch: zeros(H).unsqueeze(0), broadcast against i.
        hidden = jnp.zeros((1, H), dtype=dtype)
    hidden = jnp.broadcast_to(hidden, (B, H)).astype(dtype)

    # One-time layout plumbing in the wrapper: transpose weights to (K, N),
    # zero-pad lane dims to multiples of 128 and the sublane (batch) dim to 8.
    b_pad = _round_up(B, 8)
    d_pad = _round_up(D_in, 128)
    h_pad = _round_up(H, 128)

    state_p = jnp.pad(state, ((0, b_pad - B), (0, d_pad - D_in)))
    hidden_p = jnp.pad(hidden, ((0, b_pad - B), (0, h_pad - H)))
    wi_t_p = jnp.pad(wi.T, ((0, d_pad - D_in), (0, h_pad - H)))
    wh_t_p = jnp.pad(wh.T, ((0, h_pad - H), (0, h_pad - H)))

    kernel = functools.partial(_ctrnn_kernel, hidden_size=H, eps=float(eps))

    out_p = pl.pallas_call(
        kernel,
        out_shape=jax.ShapeDtypeStruct((b_pad, h_pad), dtype),
        in_specs=[pl.BlockSpec(memory_space=pltpu.MemorySpace.VMEM)
                  for _ in range(4)],
        out_specs=pl.BlockSpec(memory_space=pltpu.MemorySpace.VMEM),
    )(state_p, wi_t_p, hidden_p, wh_t_p)

    x = out_p[:B, :H]
    return x, x


def ctrnn_ref(state, wi, wh, hidden=None, eps=1e-5):
    """Plain-JAX reference matching the PyTorch module."""
    if hidden is None:
        hidden = jnp.zeros((1, wh.shape[0]), dtype=state.dtype)
    hp = lax.Precision.HIGHEST
    i = jnp.dot(state, wi.T, precision=hp)
    hh = jnp.dot(hidden, wh.T, precision=hp)
    mean = jnp.mean(hh, axis=-1, keepdims=True)
    var = jnp.mean((hh - mean) ** 2, axis=-1, keepdims=True)
    h = (hh - mean) / jnp.sqrt(var + eps)
    x = jnp.maximum(i + h, 0.0)
    return x, x


if __name__ == "__main__":
    # arch = (input_size, hidden_size)
    input_size, hidden_size = 16, 32
    batch = 2

    key = jax.random.PRNGKey(0)
    k_state, k_wi, k_wh, k_hid = jax.random.split(key, 4)

    state = jax.random.normal(k_state, (batch, input_size), dtype=jnp.float32)
    wi = jax.random.normal(k_wi, (hidden_size, input_size), dtype=jnp.float32) * 0.1
    wh = jax.random.normal(k_wh, (hidden_size, hidden_size), dtype=jnp.float32) * 0.1
    hidden0 = jax.random.normal(k_hid, (batch, hidden_size), dtype=jnp.float32)

    # Step with a provided hidden state (exercises the InstanceNorm path).
    x, new_hidden = ctrnn_forward(state, wi, wh, hidden0)
    jax.block_until_ready(x)
    jax.block_until_ready(new_hidden)

    x_ref, _ = ctrnn_ref(state, wi, wh, hidden0)
    assert x.shape == (batch, hidden_size), "bad output shape"
    assert jnp.allclose(x, x_ref, atol=1e-5, rtol=1e-5), \
        "mismatch vs reference (hidden given)"
    assert jnp.array_equal(x, new_hidden), "new hidden must equal x"

    # Step with hidden=None (torch creates a zero (1,H) hidden and broadcasts).
    x0, h0 = ctrnn_forward(state, wi, wh, None)
    jax.block_until_ready(x0)
    x0_ref, _ = ctrnn_ref(state, wi, wh, None)
    assert jnp.allclose(x0, x0_ref, atol=1e-5, rtol=1e-5), \
        "mismatch vs reference (hidden=None)"
    assert jnp.array_equal(x0, h0), "new hidden must equal x (hidden=None)"

    print("KERNEL_OK")
</pallas_src>

<mosaic_0001>
module attributes {stable_mosaic.version = 11 : i64} {
  func.func @_ctrnn_kernel(%arg0: memref<8x128xf32, #tpu.memory_space<vmem>>, %arg1: memref<128x128xf32, #tpu.memory_space<vmem>>, %arg2: memref<8x128xf32, #tpu.memory_space<vmem>>, %arg3: memref<128x128xf32, #tpu.memory_space<vmem>>, %arg4: memref<8x128xf32, #tpu.memory_space<vmem>>) attributes {dimension_semantics = [], scalar_prefetch = 0 : i64, scratch_operands = 0 : i64, tpu.core_type = #tpu.core_type<tc>} {
    %c0 = arith.constant 0 : index
    %c0_0 = arith.constant 0 : index
    %0 = vector.load %arg0[%c0, %c0_0] : memref<8x128xf32, #tpu.memory_space<vmem>>, vector<8x128xf32>
    %c0_1 = arith.constant 0 : index
    %c0_2 = arith.constant 0 : index
    %1 = vector.load %arg1[%c0_1, %c0_2] : memref<128x128xf32, #tpu.memory_space<vmem>>, vector<128x128xf32>
    %cst = arith.constant dense<0.000000e+00> : vector<8x128xf32>
    %2 = tpu.matmul %0, %1, %cst {dimension_numbers = #tpu.dot_dimension_numbers<[1], [0], [0], [1], [0, 0, 1, 1], [], []>} : vector<8x128xf32>, vector<128x128xf32>, vector<8x128xf32> -> vector<8x128xf32>
    %c0_3 = arith.constant 0 : index
    %c0_4 = arith.constant 0 : index
    %3 = vector.load %arg2[%c0_3, %c0_4] : memref<8x128xf32, #tpu.memory_space<vmem>>, vector<8x128xf32>
    %c0_5 = arith.constant 0 : index
    %c0_6 = arith.constant 0 : index
    %4 = vector.load %arg3[%c0_5, %c0_6] : memref<128x128xf32, #tpu.memory_space<vmem>>, vector<128x128xf32>
    %cst_7 = arith.constant dense<0.000000e+00> : vector<8x128xf32>
    %5 = tpu.matmul %3, %4, %cst_7 {dimension_numbers = #tpu.dot_dimension_numbers<[1], [0], [0], [1], [0, 0, 1, 1], [], []>} : vector<8x128xf32>, vector<128x128xf32>, vector<8x128xf32> -> vector<8x128xf32>
    %cst_8 = arith.constant dense<0.000000e+00> : vector<8xf32>
    %6 = vector.multi_reduction <add>, %5, %cst_8 [1] : vector<8x128xf32> to vector<8xf32>
    %7 = vector.shape_cast %6 : vector<8xf32> to vector<8x1xf32>
    %cst_9 = arith.constant 3.125000e-02 : f32
    %8 = vector.broadcast %cst_9 : f32 to vector<8x1xf32>
    %9 = arith.mulf %7, %8 : vector<8x1xf32>
    %10 = arith.mulf %5, %5 : vector<8x128xf32>
    %cst_10 = arith.constant dense<0.000000e+00> : vector<8xf32>
    %11 = vector.multi_reduction <add>, %10, %cst_10 [1] : vector<8x128xf32> to vector<8xf32>
    %12 = vector.shape_cast %11 : vector<8xf32> to vector<8x1xf32>
    %cst_11 = arith.constant 3.125000e-02 : f32
    %13 = vector.broadcast %cst_11 : f32 to vector<8x1xf32>
    %14 = arith.mulf %12, %13 : vector<8x1xf32>
    %15 = arith.mulf %9, %9 : vector<8x1xf32>
    %16 = arith.subf %14, %15 : vector<8x1xf32>
    %17 = vector.broadcast %9 : vector<8x1xf32> to vector<8x128xf32>
    %18 = arith.subf %5, %17 : vector<8x128xf32>
    %cst_12 = arith.constant 9.99999974E-6 : f32
    %19 = vector.broadcast %cst_12 : f32 to vector<8x1xf32>
    %20 = arith.addf %16, %19 : vector<8x1xf32>
    %21 = math.rsqrt %20 : vector<8x1xf32>
    %22 = vector.broadcast %21 : vector<8x1xf32> to vector<8x128xf32>
    %23 = arith.mulf %18, %22 : vector<8x128xf32>
    %24 = arith.addf %2, %23 : vector<8x128xf32>
    %cst_13 = arith.constant 0.000000e+00 : f32
    %25 = vector.broadcast %cst_13 : f32 to vector<8x128xf32>
    %26 = arith.maximumf %24, %25 : vector<8x128xf32>
    %c0_14 = arith.constant 0 : index
    %c0_15 = arith.constant 0 : index
    %27 = vector.load %arg4[%c0_14, %c0_15] : memref<8x128xf32, #tpu.memory_space<vmem>>, vector<8x128xf32>
    tpu.vector_store %arg4[%c0_14, %c0_15], %26 {strides = array<i32>} : memref<8x128xf32, #tpu.memory_space<vmem>>, vector<8x128xf32>,
    return
  }
}

</mosaic_0001>

<llo_original>
// kernel: tpu_custom_call.1
$region0: #{tpu_custom_call.1}
  #allocation0 [shape = 'u32[]', space=smem, size = 0x4, offset = 0x4, fixed_abs, tag = 'smem constant byte address 0x4 - core index']
  #allocation1 [shape = 'u32[144,128]{1,0:T(1,128)}', space=vmem, size = 0x12000, scoped, tag = 'internal scratch']
  %s0 = inlined_call_operand.hbm [shape: f32[8,128], index: 0, kind: input, shape index: {}]
  %s1 = inlined_call_operand.hbm [shape: f32[128,128], index: 1, kind: input, shape index: {}]
  %s2 = inlined_call_operand.hbm [shape: f32[8,128], index: 2, kind: input, shape index: {}]
  %s3 = inlined_call_operand.hbm [shape: f32[128,128], index: 3, kind: input, shape index: {}]
  %s4 = inlined_call_operand.hbm [shape: f32[8,128], index: 4, kind: output, shape index: {}]
  %s5 = sld [smem:[#allocation0]]
  $region42: #{tpu_custom_call.1} parent=0
    _
  %s7 = ssub.s32 1, %s5
  %s8 = scalar_select 0, %s7, %s5
  $region1: #{tpu_custom_call.1} parent=0
    #allocation2 [shape = 'u8[4096]{0}', space=vmem, size = 0x1000, scoped, tag = 'input window, operand 0, single buffered']
    #allocation3 [shape = 's32[1]{0}', space=sflag, size = 0x4, scoped, tag = 'scoped memory for tpu_custom_call.1']
    #allocation4 [shape = 's32[1]{0}', space=sflag, size = 0x4, scoped, tag = 'scoped memory for tpu_custom_call.1']
    #allocation5 [shape = 'u8[65536]{0}', space=vmem, size = 0x10000, scoped, tag = 'input window, operand 1, single buffered']
    #allocation6 [shape = 's32[1]{0}', space=sflag, size = 0x4, scoped, tag = 'scoped memory for tpu_custom_call.1']
    #allocation7 [shape = 'u8[4096]{0}', space=vmem, size = 0x1000, scoped, tag = 'input window, operand 2, single buffered']
    #allocation8 [shape = 'u8[65536]{0}', space=vmem, size = 0x10000, scoped, tag = 'input window, operand 3, single buffered']
    #allocation9 [shape = 's32[1]{0}', space=sflag, size = 0x4, scoped, tag = 'scoped memory for tpu_custom_call.1']
    #allocation10 [shape = 'u8[4096]{0}', space=vmem, size = 0x1000, scoped, tag = 'output window, operand 0, single buffered']
    %9 = vsyncpa [#allocation3], 0
    %10 = vsyncpa [#allocation6], 0
    %11 = vsyncpa [#allocation9], 0
    %12 = vsyncpa [#allocation4], 0
    // Predicated region
    $region2: #{tpu_custom_call.1} parent=1 // pred_check
      _
    $region3: #{tpu_custom_call.1} parent=1 // pred_check_branch
      %14 = sbr.rel (0) target = $region5
    $region4: #{tpu_custom_call.1} parent=1 // pred_region
      %s16 = ssub.s32 128, 128
      %17 = vsyncadd [#allocation3], %s16
      %s19 = sshll.u32 [#allocation2], 4
      %s20 = int_to_ptr.vmem [resolvable:$true] %s19
      %22 = dma.hbm_to_vmem [thread:$0]  %s0, 128, %s20, [#allocation3]
    $region5: #{tpu_custom_call.1} parent=1 // pred_fallthru
      _
    // Predicated region
    $region6: #{tpu_custom_call.1} parent=1 // pred_check
      _
    $region7: #{tpu_custom_call.1} parent=1 // pred_check_branch
      %24 = sbr.rel (0) target = $region9
    $region8: #{tpu_custom_call.1} parent=1 // pred_region
      %s26 = ssub.s32 2048, 2048
      %27 = vsyncadd [#allocation6], %s26
      %s28 = sshll.u32 [#allocation5], 4
      %s29 = int_to_ptr.vmem [resolvable:$true] %s28
      %34 = dma.hbm_to_vmem [thread:$0]  %s1, 2048, %s29, [#allocation6], 128, 128, 8
    $region9: #{tpu_custom_call.1} parent=1 // pred_fallthru
      _
    // Predicated region
    $region10: #{tpu_custom_call.1} parent=1 // pred_check
      _
    $region11: #{tpu_custom_call.1} parent=1 // pred_check_branch
      %36 = sbr.rel (0) target = $region13
    $region12: #{tpu_custom_call.1} parent=1 // pred_region
      %s38 = ssub.s32 128, 128
      %39 = vsyncadd [#allocation6], %s38
      %s41 = sshll.u32 [#allocation7], 4
      %s42 = int_to_ptr.vmem [resolvable:$true] %s41
      %44 = dma.hbm_to_vmem [thread:$0]  %s2, 128, %s42, [#allocation6]
    $region13: #{tpu_custom_call.1} parent=1 // pred_fallthru
      _
    // Predicated region
    $region14: #{tpu_custom_call.1} parent=1 // pred_check
      _
    $region15: #{tpu_custom_call.1} parent=1 // pred_check_branch
      %46 = sbr.rel (0) target = $region17
    $region16: #{tpu_custom_call.1} parent=1 // pred_region
      %s48 = ssub.s32 2048, 2048
      %49 = vsyncadd [#allocation9], %s48
      %s50 = sshll.u32 [#allocation8], 4
      %s51 = int_to_ptr.vmem [resolvable:$true] %s50
      %56 = dma.hbm_to_vmem [thread:$0]  %s3, 2048, %s51, [#allocation9], 128, 128, 8
    $region17: #{tpu_custom_call.1} parent=1 // pred_fallthru
      _
    // Predicated region
    $region18: #{tpu_custom_call.1} parent=1 // pred_check
      _
    $region19: #{tpu_custom_call.1} parent=1 // pred_check_branch
      %58 = sbr.rel (0) target = $region21
    $region20: #{tpu_custom_call.1} parent=1 // pred_region
      %59 = dma.done [#allocation3], 128
    $region21: #{tpu_custom_call.1} parent=1 // pred_fallthru
      _
    // Predicated region
    $region22: #{tpu_custom_call.1} parent=1 // pred_check
      _
    $region23: #{tpu_custom_call.1} parent=1 // pred_check_branch
      %61 = sbr.rel (0) target = $region25
    $region24: #{tpu_custom_call.1} parent=1 // pred_region
      %62 = dma.done [#allocation6], 2048
    $region25: #{tpu_custom_call.1} parent=1 // pred_fallthru
      _
    // Predicated region
    $region26: #{tpu_custom_call.1} parent=1 // pred_check
      _
    $region27: #{tpu_custom_call.1} parent=1 // pred_check_branch
      %64 = sbr.rel (0) target = $region29
    $region28: #{tpu_custom_call.1} parent=1 // pred_region
      %65 = dma.done [#allocation6], 128
    $region29: #{tpu_custom_call.1} parent=1 // pred_fallthru
      _
    // Predicated region
    $region30: #{tpu_custom_call.1} parent=1 // pred_check
      _
    $region31: #{tpu_custom_call.1} parent=1 // pred_check_branch
      %67 = sbr.rel (0) target = $region33
    $region32: #{tpu_custom_call.1} parent=1 // pred_region
      %68 = dma.done [#allocation9], 2048
    $region33: #{tpu_custom_call.1} parent=1 // pred_fallthru
      _
    %v69 = vld [vmem:[#allocation2] sm:$0xff]
    %v70 = vld [vmem:[#allocation5] sm:$0xff]
    %v71 = vld [vmem:[#allocation5 + $0x8] sm:$0xff]
    %v72 = vld [vmem:[#allocation5 + $0x10] sm:$0xff]
    %v73 = vld [vmem:[#allocation5 + $0x18] sm:$0xff]
    %v74 = vld [vmem:[#allocation5 + $0x20] sm:$0xff]
    %v75 = vld [vmem:[#allocation5 + $0x28] sm:$0xff]
    %v76 = vld [vmem:[#allocation5 + $0x30] sm:$0xff]
    %v77 = vld [vmem:[#allocation5 + $0x38] sm:$0xff]
    %v78 = vld [vmem:[#allocation5 + $0x40] sm:$0xff]
    %v79 = vld [vmem:[#allocation5 + $0x48] sm:$0xff]
    %v80 = vld [vmem:[#allocation5 + $0x50] sm:$0xff]
    %v81 = vld [vmem:[#allocation5 + $0x58] sm:$0xff]
    %v82 = vld [vmem:[#allocation5 + $0x60] sm:$0xff]
    %v83 = vld [vmem:[#allocation5 + $0x68] sm:$0xff]
    %v84 = vld [vmem:[#allocation5 + $0x70] sm:$0xff]
    %v85 = vld [vmem:[#allocation5 + $0x78] sm:$0xff]
    %v86 = vld [vmem:[#allocation7] sm:$0xff]
    %v87 = vld [vmem:[#allocation8] sm:$0xff]
    %v88 = vld [vmem:[#allocation8 + $0x8] sm:$0xff]
    %v89 = vld [vmem:[#allocation8 + $0x10] sm:$0xff]
    %v90 = vld [vmem:[#allocation8 + $0x18] sm:$0xff]
    %v91 = vld [vmem:[#allocation8 + $0x20] sm:$0xff]
    %v92 = vld [vmem:[#allocation8 + $0x28] sm:$0xff]
    %v93 = vld [vmem:[#allocation8 + $0x30] sm:$0xff]
    %v94 = vld [vmem:[#allocation8 + $0x38] sm:$0xff]
    %v95 = vld [vmem:[#allocation8 + $0x40] sm:$0xff]
    %v96 = vld [vmem:[#allocation8 + $0x48] sm:$0xff]
    %v97 = vld [vmem:[#allocation8 + $0x50] sm:$0xff]
    %v98 = vld [vmem:[#allocation8 + $0x58] sm:$0xff]
    %v99 = vld [vmem:[#allocation8 + $0x60] sm:$0xff]
    %v100 = vld [vmem:[#allocation8 + $0x68] sm:$0xff]
    %v101 = vld [vmem:[#allocation8 + $0x70] sm:$0xff]
    %v102 = vld [vmem:[#allocation8 + $0x78] sm:$0xff]
    %103 = vmatprep.subr.mxu0 0.0
    %104 = vmatpush1.msra.mxu0 %v87
    %105 = vmatprep.subr.mxu0 0.0
    %106 = vmatpush1.msra.mxu0 %v88
    %107 = vmatprep.subr.mxu0 0.0
    %108 = vmatpush1.msra.mxu0 %v89
    %109 = vmatprep.subr.mxu0 0.0
    %110 = vmatpush1.msra.mxu0 %v90
    %111 = vmatprep.subr.mxu0 0.0
    %112 = vmatpush1.msra.mxu0 %v91
    %113 = vmatprep.subr.mxu0 0.0
    %114 = vmatpush1.msra.mxu0 %v92
    %115 = vmatprep.subr.mxu0 0.0
    %116 = vmatpush1.msra.mxu0 %v93
    %117 = vmatprep.subr.mxu0 0.0
    %118 = vmatpush1.msra.mxu0 %v94
    %119 = vmatprep.subr.mxu0 0.0
    %120 = vmatpush1.msra.mxu0 %v95
    %121 = vmatprep.subr.mxu0 0.0
    %122 = vmatpush1.msra.mxu0 %v96
    %123 = vmatprep.subr.mxu0 0.0
    %124 = vmatpush1.msra.mxu0 %v97
    %125 = vmatprep.subr.mxu0 0.0
    %126 = vmatpush1.msra.mxu0 %v98
    %127 = vmatprep.subr.mxu0 0.0
    %128 = vmatpush1.msra.mxu0 %v99
    %129 = vmatprep.subr.mxu0 0.0
    %130 = vmatpush1.msra.mxu0 %v100
    %131 = vmatprep.subr.mxu0 0.0
    %132 = vmatpush1.msra.mxu0 %v101
    %133 = vmatprep.subr.mxu0 0.0
    %134 = vmatpush1.msra.mxu0 %v102
    %135 = vmatprep.subr.mxu0 0.0
    %136 = vmatpush1.msra.mxu0 0.0
    %137 = vmatprep.subr.mxu0 0.0
    %138 = vmatpush1.msra.mxu0 0.0
    %139 = vmatprep.subr.mxu0 0.0
    %140 = vmatpush1.msra.mxu0 0.0
    %141 = vmatprep.subr.mxu0 0.0
    %142 = vmatpush1.msra.mxu0 0.0
    %143 = vmatprep.subr.mxu0 0.0
    %144 = vmatpush1.msra.mxu0 0.0
    %145 = vmatprep.subr.mxu0 0.0
    %146 = vmatpush1.msra.mxu0 0.0
    %147 = vmatprep.subr.mxu0 0.0
    %148 = vmatpush1.msra.mxu0 0.0
    %149 = vmatprep.subr.mxu0 0.0
    %150 = vmatpush1.msra.mxu0 0.0
    %151 = vmatprep.subr.mxu0 0.0
    %152 = vmatpush1.msra.mxu0 0.0
    %153 = vmatprep.subr.mxu0 0.0
    %154 = vmatpush1.msra.mxu0 0.0
    %155 = vmatprep.subr.mxu0 0.0
    %156 = vmatpush1.msra.mxu0 0.0
    %157 = vmatprep.subr.mxu0 0.0
    %158 = vmatpush1.msra.mxu0 0.0
    %159 = vmatprep.subr.mxu0 0.0
    %160 = vmatpush1.msra.mxu0 0.0
    %161 = vmatprep.subr.mxu0 0.0
    %162 = vmatpush1.msra.mxu0 0.0
    %163 = vmatprep.subr.mxu0 0.0
    %164 = vmatpush1.msra.mxu0 0.0
    %165 = vmatprep.subr.mxu0 0.0
    %166 = vmatpush1.msra.mxu0 0.0
    %167 = vmatprep.mubr.f32.mxu0 0.0
    %168 = vmatmul.mubr.f32.gmra.mrb[0].mxu0 %v86
    %v169 = vpop.f32.mrb[0].mxu0
    %v170 = vadd.f32 0.0, %v169
    %v171 = vpop.f32.mrb[0].mxu0
    %172 = vdwg.mxu0
    %173 = vadd.xlane.f32.xlu0 %v170
    %v174 = vpop.xlane.xlu0 %173
    %v175 = vmul.f32 %v174, 0.03125
    %v176 = vmul.f32 %v170, %v170
    %177 = vadd.xlane.f32.xlu0 %v176
    %v178 = vpop.xlane.xlu0 %177
    %v179 = vmul.f32 %v178, 0.03125
    %v180 = vmul.f32 %v175, %v175
    %v181 = vsub.f32 %v179, %v180
    %v182 = vsub.f32 %v170, %v175
    %v183 = vadd.f32 %v181, 1e-05
    %v184 = vrsqrt.pop %v183
    %v185 = vmul.f32 %v182, %v184
    %186 = vmatprep.subr.mxu0 0.0
    %187 = vmatpush1.msra.mxu0 %v70
    %188 = vmatprep.subr.mxu0 0.0
    %189 = vmatpush1.msra.mxu0 %v71
    %190 = vmatprep.subr.mxu0 0.0
    %191 = vmatpush1.msra.mxu0 %v72
    %192 = vmatprep.subr.mxu0 0.0
    %193 = vmatpush1.msra.mxu0 %v73
    %194 = vmatprep.subr.mxu0 0.0
    %195 = vmatpush1.msra.mxu0 %v74
    %196 = vmatprep.subr.mxu0 0.0
    %197 = vmatpush1.msra.mxu0 %v75
    %198 = vmatprep.subr.mxu0 0.0
    %199 = vmatpush1.msra.mxu0 %v76
    %200 = vmatprep.subr.mxu0 0.0
    %201 = vmatpush1.msra.mxu0 %v77
    %202 = vmatprep.subr.mxu0 0.0
    %203 = vmatpush1.msra.mxu0 %v78
    %204 = vmatprep.subr.mxu0 0.0
    %205 = vmatpush1.msra.mxu0 %v79
    %206 = vmatprep.subr.mxu0 0.0
    %207 = vmatpush1.msra.mxu0 %v80
    %208 = vmatprep.subr.mxu0 0.0
    %209 = vmatpush1.msra.mxu0 %v81
    %210 = vmatprep.subr.mxu0 0.0
    %211 = vmatpush1.msra.mxu0 %v82
    %212 = vmatprep.subr.mxu0 0.0
    %213 = vmatpush1.msra.mxu0 %v83
    %214 = vmatprep.subr.mxu0 0.0
    %215 = vmatpush1.msra.mxu0 %v84
    %216 = vmatprep.subr.mxu0 0.0
    %217 = vmatpush1.msra.mxu0 %v85
    %218 = vmatprep.subr.mxu0 0.0
    %219 = vmatpush1.msra.mxu0 0.0
    %220 = vmatprep.subr.mxu0 0.0
    %221 = vmatpush1.msra.mxu0 0.0
    %222 = vmatprep.subr.mxu0 0.0
    %223 = vmatpush1.msra.mxu0 0.0
    %224 = vmatprep.subr.mxu0 0.0
    %225 = vmatpush1.msra.mxu0 0.0
    %226 = vmatprep.subr.mxu0 0.0
    %227 = vmatpush1.msra.mxu0 0.0
    %228 = vmatprep.subr.mxu0 0.0
    %229 = vmatpush1.msra.mxu0 0.0
    %230 = vmatprep.subr.mxu0 0.0
    %231 = vmatpush1.msra.mxu0 0.0
    %232 = vmatprep.subr.mxu0 0.0
    %233 = vmatpush1.msra.mxu0 0.0
    %234 = vmatprep.subr.mxu0 0.0
    %235 = vmatpush1.msra.mxu0 0.0
    %236 = vmatprep.subr.mxu0 0.0
    %237 = vmatpush1.msra.mxu0 0.0
    %238 = vmatprep.subr.mxu0 0.0
    %239 = vmatpush1.msra.mxu0 0.0
    %240 = vmatprep.subr.mxu0 0.0
    %241 = vmatpush1.msra.mxu0 0.0
    %242 = vmatprep.subr.mxu0 0.0
    %243 = vmatpush1.msra.mxu0 0.0
    %244 = vmatprep.subr.mxu0 0.0
    %245 = vmatpush1.msra.mxu0 0.0
    %246 = vmatprep.subr.mxu0 0.0
    %247 = vmatpush1.msra.mxu0 0.0
    %248 = vmatprep.subr.mxu0 0.0
    %249 = vmatpush1.msra.mxu0 0.0
    %250 = vmatprep.mubr.f32.mxu0 0.0
    %251 = vmatmul.mubr.f32.gmra.mrb[0].mxu0 %v69
    %v252 = vpop.f32.mrb[0].mxu0
    %v253 = vadd.f32 %v185, %v252
    %v254 = vpop.f32.mrb[0].mxu0
    %255 = vdwg.mxu0
    %v256 = vmax.f32 %v253, 0.0
    %257 = vst [vmem:[#allocation10] sm:$0xff] %v256
    // Predicated region
    $region34: #{tpu_custom_call.1} parent=1 // pred_check
      _
    $region35: #{tpu_custom_call.1} parent=1 // pred_check_branch
      %259 = sbr.rel (0) target = $region37
    $region36: #{tpu_custom_call.1} parent=1 // pred_region
      %s261 = ssub.s32 128, 128
      %262 = vsyncadd [#allocation4], %s261
      %s264 = sshll.u32 [#allocation10], 4
      %s265 = int_to_ptr.vmem [resolvable:$true] %s264
      %267 = dma.vmem_to_hbm [thread:$0]  %s265, 128, %s4, [#allocation4]
    $region37: #{tpu_custom_call.1} parent=1 // pred_fallthru
      _
    // Predicated region
    $region38: #{tpu_custom_call.1} parent=1 // pred_check
      _
    $region39: #{tpu_custom_call.1} parent=1 // pred_check_branch
      %269 = sbr.rel (0) target = $region41
    $region40: #{tpu_custom_call.1} parent=1 // pred_region
      %270 = dma.done [#allocation4], 128
    $region41: #{tpu_custom_call.1} parent=1 // pred_fallthru
      _
    %271 = vsyncpa [#allocation3], 1
    %272 = vsyncpa [#allocation6], 1
    %273 = vsyncpa [#allocation9], 1
    %274 = vsyncpa [#allocation4], 1

</llo_original>
